<compile_context>
chip_gen: v7x
topology: tpu7x:2x2x1
jax: 0.10.0
libtpu: 0.0.40
codegen_flags: <defaults>
</compile_context>

<pallas_src>
import jax
import jax.numpy as jnp
from jax.experimental import pallas as pl
from jax.experimental.pallas import tpu as pltpu

IN_FEATURES = 16199
OUT_FEATURES = 1

K_PAD = 16384          # 128 * 128, lane-tile friendly
KR = 128               # reshaped weight rows (sublane-dim chunks)
KC = 128               # reshaped weight cols (lane dim)
N_LANES = 128          # lane-dense output slab width


def _svm_kernel(x_ref, w_ref, b_ref, o_ref):
    """out[b, :] = sum(x[b] * w) + bias, broadcast across 128 output lanes.

    x_ref: (B_PAD, 128, 128) f32   w_ref: (128, 128) f32
    b_ref: (1, 128) f32            o_ref: (B_PAD, 128) f32
    """
    x = x_ref[...]                                   # (B_PAD, 128, 128)
    w = w_ref[...]                                   # (128, 128)
    prod = x * w[None, :, :]                         # VPU elementwise, f32
    partial = jnp.sum(prod, axis=2)                  # lane reduce -> (B_PAD, 128)
    r = jnp.sum(partial, axis=1, keepdims=True)      # lane reduce -> (B_PAD, 1)
    o_ref[...] = r + b_ref[...]                      # unmasked (B_PAD, 128) store


def prepare_params(weight, bias):
    """One-time (hoisted) padding/reshape of the nn.Linear parameters.

    weight: (1, 16199) f32, bias: (1,) f32
    returns w_p: (128, 128) f32, b_p: (1, 128) f32
    """
    w_vec = (
        jnp.zeros((K_PAD,), jnp.float32)
        .at[:IN_FEATURES]
        .set(weight.reshape(-1).astype(jnp.float32))
    )
    w_p = w_vec.reshape(KR, KC)
    b_p = jnp.full((1, N_LANES), bias.astype(jnp.float32)[0], dtype=jnp.float32)
    return w_p, b_p


@jax.jit
def svm_forward(x, w_p, b_p):
    """x: (B, 16199) f32, w_p: (128, 128) f32, b_p: (1, 128) f32 -> (B, 1) f32."""
    B = x.shape[0]
    b_pad = max(8, ((B + 7) // 8) * 8)   # sublane-aligned, supports any B

    # Zero-pad the runtime input (exact) and view as (B_PAD, 128, 128).
    x_p = (
        jnp.zeros((b_pad, K_PAD), jnp.float32)
        .at[:B, :IN_FEATURES]
        .set(x.astype(jnp.float32))
        .reshape(b_pad, KR, KC)
    )

    out_p = pl.pallas_call(
        _svm_kernel,
        out_shape=jax.ShapeDtypeStruct((b_pad, N_LANES), jnp.float32),
        grid=(1,),
        in_specs=[
            pl.BlockSpec((b_pad, KR, KC), lambda i: (0, 0, 0)),   # x slab (resident)
            pl.BlockSpec((KR, KC), lambda i: (0, 0)),             # slim weight
            pl.BlockSpec((1, N_LANES), lambda i: (0, 0)),         # bias (lane bcast)
        ],
        out_specs=pl.BlockSpec((b_pad, N_LANES), lambda i: (0, 0)),
        compiler_params=pltpu.CompilerParams(
            dimension_semantics=("arbitrary",),
        ),
    )(x_p, w_p, b_p)

    return out_p[:B, :OUT_FEATURES]


if __name__ == "__main__":
    key = jax.random.PRNGKey(0)
    kx, kw, kb = jax.random.split(key, 3)

    B = 2
    x = jax.random.normal(kx, (B, IN_FEATURES), dtype=jnp.float32)

    # Deterministic param init mimicking nn.Linear's uniform(-1/sqrt(K), 1/sqrt(K)).
    bound = 1.0 / jnp.sqrt(jnp.float32(IN_FEATURES))
    weight = jax.random.uniform(
        kw, (OUT_FEATURES, IN_FEATURES), jnp.float32, -bound, bound
    )
    bias = jax.random.uniform(kb, (OUT_FEATURES,), jnp.float32, -bound, bound)

    # Hoisted one-time param prep (not in the per-call path).
    w_p, b_p = prepare_params(weight, bias)
    w_p, b_p = jax.block_until_ready((w_p, b_p))

    out = svm_forward(x, w_p, b_p)
    out = jax.block_until_ready(out)

    # Pure-JAX reference check (same math as torch.nn.Linear forward).
    ref = x @ weight.T + bias
    assert out.shape == (B, 1), out.shape
    assert jnp.allclose(out, ref, atol=1e-3, rtol=1e-3), (out, ref)

    print("KERNEL_OK")
</pallas_src>

<mosaic_0001>
module attributes {stable_mosaic.version = 11 : i64} {
  func.func @_svm_kernel(%arg0: i32, %arg1: memref<8x128x128xf32, #tpu.memory_space<vmem>>, %arg2: memref<128x128xf32, #tpu.memory_space<vmem>>, %arg3: memref<1x128xf32, #tpu.memory_space<vmem>>, %arg4: memref<8x128xf32, #tpu.memory_space<vmem>>) attributes {dimension_semantics = [#tpu.dimension_semantics<arbitrary>], iteration_bounds = array<i64: 1>, scalar_prefetch = 0 : i64, scratch_operands = 0 : i64, tpu.core_type = #tpu.core_type<tc>, window_params = [{pipeline_mode = #tpu.pipeline_mode<synchronous>, transform_indices = @transform_0, window_bounds = array<i64: 8, 128, 128>}, {pipeline_mode = #tpu.pipeline_mode<synchronous>, transform_indices = @transform_1, window_bounds = array<i64: 128, 128>}, {pipeline_mode = #tpu.pipeline_mode<synchronous>, transform_indices = @transform_2, window_bounds = array<i64: 1, 128>}, {pipeline_mode = #tpu.pipeline_mode<synchronous>, transform_indices = @transform_3, window_bounds = array<i64: 8, 128>}]} {
    %c0 = arith.constant 0 : index
    %c0_0 = arith.constant 0 : index
    %c0_1 = arith.constant 0 : index
    %0 = vector.load %arg1[%c0, %c0_0, %c0_1] : memref<8x128x128xf32, #tpu.memory_space<vmem>>, vector<8x128x128xf32>
    %c0_2 = arith.constant 0 : index
    %c0_3 = arith.constant 0 : index
    %1 = vector.load %arg2[%c0_2, %c0_3] : memref<128x128xf32, #tpu.memory_space<vmem>>, vector<128x128xf32>
    %2 = vector.shape_cast %1 : vector<128x128xf32> to vector<1x128x128xf32>
    %3 = vector.broadcast %2 : vector<1x128x128xf32> to vector<8x128x128xf32>
    %4 = arith.mulf %0, %3 : vector<8x128x128xf32>
    %cst = arith.constant dense<0.000000e+00> : vector<8x128xf32>
    %5 = vector.multi_reduction <add>, %4, %cst [2] : vector<8x128x128xf32> to vector<8x128xf32>
    %cst_4 = arith.constant dense<0.000000e+00> : vector<8xf32>
    %6 = vector.multi_reduction <add>, %5, %cst_4 [1] : vector<8x128xf32> to vector<8xf32>
    %7 = vector.shape_cast %6 : vector<8xf32> to vector<8x1xf32>
    %c0_5 = arith.constant 0 : index
    %c0_6 = arith.constant 0 : index
    %8 = vector.load %arg3[%c0_5, %c0_6] : memref<1x128xf32, #tpu.memory_space<vmem>>, vector<1x128xf32>
    %9 = vector.broadcast %7 : vector<8x1xf32> to vector<8x128xf32>
    %10 = vector.broadcast %8 : vector<1x128xf32> to vector<8x128xf32>
    %11 = arith.addf %9, %10 : vector<8x128xf32>
    %c0_7 = arith.constant 0 : index
    %c0_8 = arith.constant 0 : index
    %12 = vector.load %arg4[%c0_7, %c0_8] : memref<8x128xf32, #tpu.memory_space<vmem>>, vector<8x128xf32>
    tpu.vector_store %arg4[%c0_7, %c0_8], %11 {strides = array<i32>} : memref<8x128xf32, #tpu.memory_space<vmem>>, vector<8x128xf32>,
    return
  }
  func.func @transform_0(%arg0: i32) -> (i32, i32, i32) {
    %c0_i32 = arith.constant 0 : i32
    %c0_i32_0 = arith.constant 0 : i32
    %c0_i32_1 = arith.constant 0 : i32
    %c0_i32_2 = arith.constant 0 : i32
    return %c0_i32, %c0_i32_0, %c0_i32_1 : i32, i32, i32
  }
  func.func @transform_1(%arg0: i32) -> (i32, i32) {
    %c0_i32 = arith.constant 0 : i32
    %c0_i32_0 = arith.constant 0 : i32
    %c0_i32_1 = arith.constant 0 : i32
    return %c0_i32, %c0_i32_0 : i32, i32
  }
  func.func @transform_2(%arg0: i32) -> (i32, i32) {
    %c0_i32 = arith.constant 0 : i32
    %c0_i32_0 = arith.constant 0 : i32
    %c0_i32_1 = arith.constant 0 : i32
    return %c0_i32, %c0_i32_0 : i32, i32
  }
  func.func @transform_3(%arg0: i32) -> (i32, i32) {
    %c0_i32 = arith.constant 0 : i32
    %c0_i32_0 = arith.constant 0 : i32
    %c0_i32_1 = arith.constant 0 : i32
    return %c0_i32, %c0_i32_0 : i32, i32
  }
}

</mosaic_0001>

<llo_original>
// kernel: svm_forward.1
$region0: #{svm_forward.1}
  #allocation0 [shape = 'u32[]', space=smem, size = 0x4, offset = 0x4, fixed_abs, tag = 'smem constant byte address 0x4 - core index']
  #allocation1 [shape = 'u32[144,128]{1,0:T(1,128)}', space=vmem, size = 0x12000, scoped, tag = 'internal scratch']
  %s0 = inlined_call_operand.vmem [shape: f32[8,128,128], index: 0, kind: input, shape index: {}]
  %s1 = inlined_call_operand.vmem [shape: f32[128,128], index: 1, kind: input, shape index: {}]
  %s2 = inlined_call_operand.vmem [shape: f32[1,128], index: 2, kind: input, shape index: {}]
  %s3 = inlined_call_operand.vmem [shape: f32[8,128], index: 3, kind: output, shape index: {}]
  %s4 = sld [smem:[#allocation0]]
  $region22: #{svm_forward.1} parent=0
    _
  %s6 = ssub.s32 1, %s4
  %s7 = scalar_select 0, %s6, %s4
  // Predicated region
  $region2: #{svm_forward.1} parent=0 // pred_check
    _
  $region3: #{svm_forward.1} parent=0 // pred_check_branch
    %9 = sbr.rel (0) target = $region5
  $region4: #{svm_forward.1} parent=0 // pred_region
    _
  $region5: #{svm_forward.1} parent=0 // pred_fallthru
    _
  // Predicated region
  $region6: #{svm_forward.1} parent=0 // pred_check
    _
  $region7: #{svm_forward.1} parent=0 // pred_check_branch
    %11 = sbr.rel (0) target = $region9
  $region8: #{svm_forward.1} parent=0 // pred_region
    _
  $region9: #{svm_forward.1} parent=0 // pred_fallthru
    _
  // Predicated region
  $region10: #{svm_forward.1} parent=0 // pred_check
    _
  $region11: #{svm_forward.1} parent=0 // pred_check_branch
    %13 = sbr.rel (0) target = $region13
  $region12: #{svm_forward.1} parent=0 // pred_region
    _
  $region13: #{svm_forward.1} parent=0 // pred_fallthru
    _
  %v14 = vld [vmem:[%s0] sm:$0xff]
  %v15 = vld [vmem:[%s0 + $0x8] sm:$0xff]
  %v16 = vld [vmem:[%s0 + $0x10] sm:$0xff]
  %v17 = vld [vmem:[%s0 + $0x18] sm:$0xff]
  %v18 = vld [vmem:[%s0 + $0x20] sm:$0xff]
  %v19 = vld [vmem:[%s0 + $0x28] sm:$0xff]
  %v20 = vld [vmem:[%s0 + $0x30] sm:$0xff]
  %v21 = vld [vmem:[%s0 + $0x38] sm:$0xff]
  %v22 = vld [vmem:[%s0 + $0x40] sm:$0xff]
  %v23 = vld [vmem:[%s0 + $0x48] sm:$0xff]
  %v24 = vld [vmem:[%s0 + $0x50] sm:$0xff]
  %v25 = vld [vmem:[%s0 + $0x58] sm:$0xff]
  %v26 = vld [vmem:[%s0 + $0x60] sm:$0xff]
  %v27 = vld [vmem:[%s0 + $0x68] sm:$0xff]
  %v28 = vld [vmem:[%s0 + $0x70] sm:$0xff]
  %v29 = vld [vmem:[%s0 + $0x78] sm:$0xff]
  %v30 = vld [vmem:[%s0 + $0x80] sm:$0xff]
  %v31 = vld [vmem:[%s0 + $0x88] sm:$0xff]
  %v32 = vld [vmem:[%s0 + $0x90] sm:$0xff]
  %v33 = vld [vmem:[%s0 + $0x98] sm:$0xff]
  %v34 = vld [vmem:[%s0 + $0xa0] sm:$0xff]
  %v35 = vld [vmem:[%s0 + $0xa8] sm:$0xff]
  %v36 = vld [vmem:[%s0 + $0xb0] sm:$0xff]
  %v37 = vld [vmem:[%s0 + $0xb8] sm:$0xff]
  %v38 = vld [vmem:[%s0 + $0xc0] sm:$0xff]
  %v39 = vld [vmem:[%s0 + $0xc8] sm:$0xff]
  %v40 = vld [vmem:[%s0 + $0xd0] sm:$0xff]
  %v41 = vld [vmem:[%s0 + $0xd8] sm:$0xff]
  %v42 = vld [vmem:[%s0 + $0xe0] sm:$0xff]
  %v43 = vld [vmem:[%s0 + $0xe8] sm:$0xff]
  %v44 = vld [vmem:[%s0 + $0xf0] sm:$0xff]
  %v45 = vld [vmem:[%s0 + $0xf8] sm:$0xff]
  %v46 = vld [vmem:[%s0 + $0x100] sm:$0xff]
  %v47 = vld [vmem:[%s0 + $0x108] sm:$0xff]
  %v48 = vld [vmem:[%s0 + $0x110] sm:$0xff]
  %v49 = vld [vmem:[%s0 + $0x118] sm:$0xff]
  %v50 = vld [vmem:[%s0 + $0x120] sm:$0xff]
  %v51 = vld [vmem:[%s0 + $0x128] sm:$0xff]
  %v52 = vld [vmem:[%s0 + $0x130] sm:$0xff]
  %v53 = vld [vmem:[%s0 + $0x138] sm:$0xff]
  %v54 = vld [vmem:[%s0 + $0x140] sm:$0xff]
  %v55 = vld [vmem:[%s0 + $0x148] sm:$0xff]
  %v56 = vld [vmem:[%s0 + $0x150] sm:$0xff]
  %v57 = vld [vmem:[%s0 + $0x158] sm:$0xff]
  %v58 = vld [vmem:[%s0 + $0x160] sm:$0xff]
  %v59 = vld [vmem:[%s0 + $0x168] sm:$0xff]
  %v60 = vld [vmem:[%s0 + $0x170] sm:$0xff]
  %v61 = vld [vmem:[%s0 + $0x178] sm:$0xff]
  %v62 = vld [vmem:[%s0 + $0x180] sm:$0xff]
  %v63 = vld [vmem:[%s0 + $0x188] sm:$0xff]
  %v64 = vld [vmem:[%s0 + $0x190] sm:$0xff]
  %v65 = vld [vmem:[%s0 + $0x198] sm:$0xff]
  %v66 = vld [vmem:[%s0 + $0x1a0] sm:$0xff]
  %v67 = vld [vmem:[%s0 + $0x1a8] sm:$0xff]
  %v68 = vld [vmem:[%s0 + $0x1b0] sm:$0xff]
  %v69 = vld [vmem:[%s0 + $0x1b8] sm:$0xff]
  %v70 = vld [vmem:[%s0 + $0x1c0] sm:$0xff]
  %v71 = vld [vmem:[%s0 + $0x1c8] sm:$0xff]
  %v72 = vld [vmem:[%s0 + $0x1d0] sm:$0xff]
  %v73 = vld [vmem:[%s0 + $0x1d8] sm:$0xff]
  %v74 = vld [vmem:[%s0 + $0x1e0] sm:$0xff]
  %v75 = vld [vmem:[%s0 + $0x1e8] sm:$0xff]
  %v76 = vld [vmem:[%s0 + $0x1f0] sm:$0xff]
  %v77 = vld [vmem:[%s0 + $0x1f8] sm:$0xff]
  %v78 = vld [vmem:[%s0 + $0x200] sm:$0xff]
  %v79 = vld [vmem:[%s0 + $0x208] sm:$0xff]
  %v80 = vld [vmem:[%s0 + $0x210] sm:$0xff]
  %v81 = vld [vmem:[%s0 + $0x218] sm:$0xff]
  %v82 = vld [vmem:[%s0 + $0x220] sm:$0xff]
  %v83 = vld [vmem:[%s0 + $0x228] sm:$0xff]
  %v84 = vld [vmem:[%s0 + $0x230] sm:$0xff]
  %v85 = vld [vmem:[%s0 + $0x238] sm:$0xff]
  %v86 = vld [vmem:[%s0 + $0x240] sm:$0xff]
  %v87 = vld [vmem:[%s0 + $0x248] sm:$0xff]
  %v88 = vld [vmem:[%s0 + $0x250] sm:$0xff]
  %v89 = vld [vmem:[%s0 + $0x258] sm:$0xff]
  %v90 = vld [vmem:[%s0 + $0x260] sm:$0xff]
  %v91 = vld [vmem:[%s0 + $0x268] sm:$0xff]
  %v92 = vld [vmem:[%s0 + $0x270] sm:$0xff]
  %v93 = vld [vmem:[%s0 + $0x278] sm:$0xff]
  %v94 = vld [vmem:[%s0 + $0x280] sm:$0xff]
  %v95 = vld [vmem:[%s0 + $0x288] sm:$0xff]
  %v96 = vld [vmem:[%s0 + $0x290] sm:$0xff]
  %v97 = vld [vmem:[%s0 + $0x298] sm:$0xff]
  %v98 = vld [vmem:[%s0 + $0x2a0] sm:$0xff]
  %v99 = vld [vmem:[%s0 + $0x2a8] sm:$0xff]
  %v100 = vld [vmem:[%s0 + $0x2b0] sm:$0xff]
  %v101 = vld [vmem:[%s0 + $0x2b8] sm:$0xff]
  %v102 = vld [vmem:[%s0 + $0x2c0] sm:$0xff]
  %v103 = vld [vmem:[%s0 + $0x2c8] sm:$0xff]
  %v104 = vld [vmem:[%s0 + $0x2d0] sm:$0xff]
  %v105 = vld [vmem:[%s0 + $0x2d8] sm:$0xff]
  %v106 = vld [vmem:[%s0 + $0x2e0] sm:$0xff]
  %v107 = vld [vmem:[%s0 + $0x2e8] sm:$0xff]
  %v108 = vld [vmem:[%s0 + $0x2f0] sm:$0xff]
  %v109 = vld [vmem:[%s0 + $0x2f8] sm:$0xff]
  %v110 = vld [vmem:[%s0 + $0x300] sm:$0xff]
  %v111 = vld [vmem:[%s0 + $0x308] sm:$0xff]
  %v112 = vld [vmem:[%s0 + $0x310] sm:$0xff]
  %v113 = vld [vmem:[%s0 + $0x318] sm:$0xff]
  %v114 = vld [vmem:[%s0 + $0x320] sm:$0xff]
  %v115 = vld [vmem:[%s0 + $0x328] sm:$0xff]
  %v116 = vld [vmem:[%s0 + $0x330] sm:$0xff]
  %v117 = vld [vmem:[%s0 + $0x338] sm:$0xff]
  %v118 = vld [vmem:[%s0 + $0x340] sm:$0xff]
  %v119 = vld [vmem:[%s0 + $0x348] sm:$0xff]
  %v120 = vld [vmem:[%s0 + $0x350] sm:$0xff]
  %v121 = vld [vmem:[%s0 + $0x358] sm:$0xff]
  %v122 = vld [vmem:[%s0 + $0x360] sm:$0xff]
  %v123 = vld [vmem:[%s0 + $0x368] sm:$0xff]
  %v124 = vld [vmem:[%s0 + $0x370] sm:$0xff]
  %v125 = vld [vmem:[%s0 + $0x378] sm:$0xff]
  %v126 = vld [vmem:[%s0 + $0x380] sm:$0xff]
  %v127 = vld [vmem:[%s0 + $0x388] sm:$0xff]
  %v128 = vld [vmem:[%s0 + $0x390] sm:$0xff]
  %v129 = vld [vmem:[%s0 + $0x398] sm:$0xff]
  %v130 = vld [vmem:[%s0 + $0x3a0] sm:$0xff]
  %v131 = vld [vmem:[%s0 + $0x3a8] sm:$0xff]
  %v132 = vld [vmem:[%s0 + $0x3b0] sm:$0xff]
  %v133 = vld [vmem:[%s0 + $0x3b8] sm:$0xff]
  %v134 = vld [vmem:[%s0 + $0x3c0] sm:$0xff]
  %v135 = vld [vmem:[%s0 + $0x3c8] sm:$0xff]
  %v136 = vld [vmem:[%s0 + $0x3d0] sm:$0xff]
  %v137 = vld [vmem:[%s0 + $0x3d8] sm:$0xff]
  %v138 = vld [vmem:[%s0 + $0x3e0] sm:$0xff]
  %v139 = vld [vmem:[%s0 + $0x3e8] sm:$0xff]
  %v140 = vld [vmem:[%s0 + $0x3f0] sm:$0xff]
  %v141 = vld [vmem:[%s0 + $0x3f8] sm:$0xff]
  %v142 = vld [vmem:[%s1] sm:$0xff]
  %v143 = vld [vmem:[%s1 + $0x8] sm:$0xff]
  %v144 = vld [vmem:[%s1 + $0x10] sm:$0xff]
  %v145 = vld [vmem:[%s1 + $0x18] sm:$0xff]
  %v146 = vld [vmem:[%s1 + $0x20] sm:$0xff]
  %v147 = vld [vmem:[%s1 + $0x28] sm:$0xff]
  %v148 = vld [vmem:[%s1 + $0x30] sm:$0xff]
  %v149 = vld [vmem:[%s1 + $0x38] sm:$0xff]
  %v150 = vld [vmem:[%s1 + $0x40] sm:$0xff]
  %v151 = vld [vmem:[%s1 + $0x48] sm:$0xff]
  %v152 = vld [vmem:[%s1 + $0x50] sm:$0xff]
  %v153 = vld [vmem:[%s1 + $0x58] sm:$0xff]
  %v154 = vld [vmem:[%s1 + $0x60] sm:$0xff]
  %v155 = vld [vmem:[%s1 + $0x68] sm:$0xff]
  %v156 = vld [vmem:[%s1 + $0x70] sm:$0xff]
  %v157 = vld [vmem:[%s1 + $0x78] sm:$0xff]
  %v158 = vmul.f32 %v14, %v142
  %v159 = vmul.f32 %v15, %v143
  %v160 = vmul.f32 %v16, %v144
  %v161 = vmul.f32 %v17, %v145
  %v162 = vmul.f32 %v18, %v146
  %v163 = vmul.f32 %v19, %v147
  %v164 = vmul.f32 %v20, %v148
  %v165 = vmul.f32 %v21, %v149
  %v166 = vmul.f32 %v22, %v150
  %v167 = vmul.f32 %v23, %v151
  %v168 = vmul.f32 %v24, %v152
  %v169 = vmul.f32 %v25, %v153
  %v170 = vmul.f32 %v26, %v154
  %v171 = vmul.f32 %v27, %v155
  %v172 = vmul.f32 %v28, %v156
  %v173 = vmul.f32 %v29, %v157
  %v174 = vmul.f32 %v30, %v142
  %v175 = vmul.f32 %v31, %v143
  %v176 = vmul.f32 %v32, %v144
  %v177 = vmul.f32 %v33, %v145
  %v178 = vmul.f32 %v34, %v146
  %v179 = vmul.f32 %v35, %v147
  %v180 = vmul.f32 %v36, %v148
  %v181 = vmul.f32 %v37, %v149
  %v182 = vmul.f32 %v38, %v150
  %v183 = vmul.f32 %v39, %v151
  %v184 = vmul.f32 %v40, %v152
  %v185 = vmul.f32 %v41, %v153
  %v186 = vmul.f32 %v42, %v154
  %v187 = vmul.f32 %v43, %v155
  %v188 = vmul.f32 %v44, %v156
  %v189 = vmul.f32 %v45, %v157
  %v190 = vmul.f32 %v46, %v142
  %v191 = vmul.f32 %v47, %v143
  %v192 = vmul.f32 %v48, %v144
  %v193 = vmul.f32 %v49, %v145
  %v194 = vmul.f32 %v50, %v146
  %v195 = vmul.f32 %v51, %v147
  %v196 = vmul.f32 %v52, %v148
  %v197 = vmul.f32 %v53, %v149
  %v198 = vmul.f32 %v54, %v150
  %v199 = vmul.f32 %v55, %v151
  %v200 = vmul.f32 %v56, %v152
  %v201 = vmul.f32 %v57, %v153
  %v202 = vmul.f32 %v58, %v154
  %v203 = vmul.f32 %v59, %v155
  %v204 = vmul.f32 %v60, %v156
  %v205 = vmul.f32 %v61, %v157
  %v206 = vmul.f32 %v62, %v142
  %v207 = vmul.f32 %v63, %v143
  %v208 = vmul.f32 %v64, %v144
  %v209 = vmul.f32 %v65, %v145
  %v210 = vmul.f32 %v66, %v146
  %v211 = vmul.f32 %v67, %v147
  %v212 = vmul.f32 %v68, %v148
  %v213 = vmul.f32 %v69, %v149
  %v214 = vmul.f32 %v70, %v150
  %v215 = vmul.f32 %v71, %v151
  %v216 = vmul.f32 %v72, %v152
  %v217 = vmul.f32 %v73, %v153
  %v218 = vmul.f32 %v74, %v154
  %v219 = vmul.f32 %v75, %v155
  %v220 = vmul.f32 %v76, %v156
  %v221 = vmul.f32 %v77, %v157
  %v222 = vmul.f32 %v78, %v142
  %v223 = vmul.f32 %v79, %v143
  %v224 = vmul.f32 %v80, %v144
  %v225 = vmul.f32 %v81, %v145
  %v226 = vmul.f32 %v82, %v146
  %v227 = vmul.f32 %v83, %v147
  %v228 = vmul.f32 %v84, %v148
  %v229 = vmul.f32 %v85, %v149
  %v230 = vmul.f32 %v86, %v150
  %v231 = vmul.f32 %v87, %v151
  %v232 = vmul.f32 %v88, %v152
  %v233 = vmul.f32 %v89, %v153
  %v234 = vmul.f32 %v90, %v154
  %v235 = vmul.f32 %v91, %v155
  %v236 = vmul.f32 %v92, %v156
  %v237 = vmul.f32 %v93, %v157
  %v238 = vmul.f32 %v94, %v142
  %v239 = vmul.f32 %v95, %v143
  %v240 = vmul.f32 %v96, %v144
  %v241 = vmul.f32 %v97, %v145
  %v242 = vmul.f32 %v98, %v146
  %v243 = vmul.f32 %v99, %v147
  %v244 = vmul.f32 %v100, %v148
  %v245 = vmul.f32 %v101, %v149
  %v246 = vmul.f32 %v102, %v150
  %v247 = vmul.f32 %v103, %v151
  %v248 = vmul.f32 %v104, %v152
  %v249 = vmul.f32 %v105, %v153
  %v250 = vmul.f32 %v106, %v154
  %v251 = vmul.f32 %v107, %v155
  %v252 = vmul.f32 %v108, %v156
  %v253 = vmul.f32 %v109, %v157
  %v254 = vmul.f32 %v110, %v142
  %v255 = vmul.f32 %v111, %v143
  %v256 = vmul.f32 %v112, %v144
  %v257 = vmul.f32 %v113, %v145
  %v258 = vmul.f32 %v114, %v146
  %v259 = vmul.f32 %v115, %v147
  %v260 = vmul.f32 %v116, %v148
  %v261 = vmul.f32 %v117, %v149
  %v262 = vmul.f32 %v118, %v150
  %v263 = vmul.f32 %v119, %v151
  %v264 = vmul.f32 %v120, %v152
  %v265 = vmul.f32 %v121, %v153
  %v266 = vmul.f32 %v122, %v154
  %v267 = vmul.f32 %v123, %v155
  %v268 = vmul.f32 %v124, %v156
  %v269 = vmul.f32 %v125, %v157
  %v270 = vmul.f32 %v126, %v142
  %v271 = vmul.f32 %v127, %v143
  %v272 = vmul.f32 %v128, %v144
  %v273 = vmul.f32 %v129, %v145
  %v274 = vmul.f32 %v130, %v146
  %v275 = vmul.f32 %v131, %v147
  %v276 = vmul.f32 %v132, %v148
  %v277 = vmul.f32 %v133, %v149
  %v278 = vmul.f32 %v134, %v150
  %v279 = vmul.f32 %v135, %v151
  %v280 = vmul.f32 %v136, %v152
  %v281 = vmul.f32 %v137, %v153
  %v282 = vmul.f32 %v138, %v154
  %v283 = vmul.f32 %v139, %v155
  %v284 = vmul.f32 %v140, %v156
  %v285 = vmul.f32 %v141, %v157
  %286 = vadd.xlane.f32.xlu0 %v158
  %v287 = vpop.xlane.xlu0 %286
  %288 = vadd.xlane.f32.xlu0 %v159
  %v289 = vpop.xlane.xlu0 %288
  %290 = vadd.xlane.f32.xlu0 %v160
  %v291 = vpop.xlane.xlu0 %290
  %292 = vadd.xlane.f32.xlu0 %v161
  %v293 = vpop.xlane.xlu0 %292
  %294 = vadd.xlane.f32.xlu0 %v162
  %v295 = vpop.xlane.xlu0 %294
  %296 = vadd.xlane.f32.xlu0 %v163
  %v297 = vpop.xlane.xlu0 %296
  %298 = vadd.xlane.f32.xlu0 %v164
  %v299 = vpop.xlane.xlu0 %298
  %300 = vadd.xlane.f32.xlu0 %v165
  %v301 = vpop.xlane.xlu0 %300
  %302 = vadd.xlane.f32.xlu0 %v166
  %v303 = vpop.xlane.xlu0 %302
  %304 = vadd.xlane.f32.xlu0 %v167
  %v305 = vpop.xlane.xlu0 %304
  %306 = vadd.xlane.f32.xlu0 %v168
  %v307 = vpop.xlane.xlu0 %306
  %308 = vadd.xlane.f32.xlu0 %v169
  %v309 = vpop.xlane.xlu0 %308
  %310 = vadd.xlane.f32.xlu0 %v170
  %v311 = vpop.xlane.xlu0 %310
  %312 = vadd.xlane.f32.xlu0 %v171
  %v313 = vpop.xlane.xlu0 %312
  %314 = vadd.xlane.f32.xlu0 %v172
  %v315 = vpop.xlane.xlu0 %314
  %316 = vadd.xlane.f32.xlu0 %v173
  %v317 = vpop.xlane.xlu0 %316
  %318 = vadd.xlane.f32.xlu0 %v174
  %v319 = vpop.xlane.xlu0 %318
  %320 = vadd.xlane.f32.xlu0 %v175
  %v321 = vpop.xlane.xlu0 %320
  %322 = vadd.xlane.f32.xlu0 %v176
  %v323 = vpop.xlane.xlu0 %322
  %324 = vadd.xlane.f32.xlu0 %v177
  %v325 = vpop.xlane.xlu0 %324
  %326 = vadd.xlane.f32.xlu0 %v178
  %v327 = vpop.xlane.xlu0 %326
  %328 = vadd.xlane.f32.xlu0 %v179
  %v329 = vpop.xlane.xlu0 %328
  %330 = vadd.xlane.f32.xlu0 %v180
  %v331 = vpop.xlane.xlu0 %330
  %332 = vadd.xlane.f32.xlu0 %v181
  %v333 = vpop.xlane.xlu0 %332
  %334 = vadd.xlane.f32.xlu0 %v182
  %v335 = vpop.xlane.xlu0 %334
  %336 = vadd.xlane.f32.xlu0 %v183
  %v337 = vpop.xlane.xlu0 %336
  %338 = vadd.xlane.f32.xlu0 %v184
  %v339 = vpop.xlane.xlu0 %338
  %340 = vadd.xlane.f32.xlu0 %v185
  %v341 = vpop.xlane.xlu0 %340
  %342 = vadd.xlane.f32.xlu0 %v186
  %v343 = vpop.xlane.xlu0 %342
  %344 = vadd.xlane.f32.xlu0 %v187
  %v345 = vpop.xlane.xlu0 %344
  %346 = vadd.xlane.f32.xlu0 %v188
  %v347 = vpop.xlane.xlu0 %346
  %348 = vadd.xlane.f32.xlu0 %v189
  %v349 = vpop.xlane.xlu0 %348
  %350 = vadd.xlane.f32.xlu0 %v190
  %v351 = vpop.xlane.xlu0 %350
  %352 = vadd.xlane.f32.xlu0 %v191
  %v353 = vpop.xlane.xlu0 %352
  %354 = vadd.xlane.f32.xlu0 %v192
  %v355 = vpop.xlane.xlu0 %354
  %356 = vadd.xlane.f32.xlu0 %v193
  %v357 = vpop.xlane.xlu0 %356
  %358 = vadd.xlane.f32.xlu0 %v194
  %v359 = vpop.xlane.xlu0 %358
  %360 = vadd.xlane.f32.xlu0 %v195
  %v361 = vpop.xlane.xlu0 %360
  %362 = vadd.xlane.f32.xlu0 %v196
  %v363 = vpop.xlane.xlu0 %362
  %364 = vadd.xlane.f32.xlu0 %v197
  %v365 = vpop.xlane.xlu0 %364
  %366 = vadd.xlane.f32.xlu0 %v198
  %v367 = vpop.xlane.xlu0 %366
  %368 = vadd.xlane.f32.xlu0 %v199
  %v369 = vpop.xlane.xlu0 %368
  %370 = vadd.xlane.f32.xlu0 %v200
  %v371 = vpop.xlane.xlu0 %370
  %372 = vadd.xlane.f32.xlu0 %v201
  %v373 = vpop.xlane.xlu0 %372
  %374 = vadd.xlane.f32.xlu0 %v202
  %v375 = vpop.xlane.xlu0 %374
  %376 = vadd.xlane.f32.xlu0 %v203
  %v377 = vpop.xlane.xlu0 %376
  %378 = vadd.xlane.f32.xlu0 %v204
  %v379 = vpop.xlane.xlu0 %378
  %380 = vadd.xlane.f32.xlu0 %v205
  %v381 = vpop.xlane.xlu0 %380
  %382 = vadd.xlane.f32.xlu0 %v206
  %v383 = vpop.xlane.xlu0 %382
  %384 = vadd.xlane.f32.xlu0 %v207
  %v385 = vpop.xlane.xlu0 %384
  %386 = vadd.xlane.f32.xlu0 %v208
  %v387 = vpop.xlane.xlu0 %386
  %388 = vadd.xlane.f32.xlu0 %v209
  %v389 = vpop.xlane.xlu0 %388
  %390 = vadd.xlane.f32.xlu0 %v210
  %v391 = vpop.xlane.xlu0 %390
  %392 = vadd.xlane.f32.xlu0 %v211
  %v393 = vpop.xlane.xlu0 %392
  %394 = vadd.xlane.f32.xlu0 %v212
  %v395 = vpop.xlane.xlu0 %394
  %396 = vadd.xlane.f32.xlu0 %v213
  %v397 = vpop.xlane.xlu0 %396
  %398 = vadd.xlane.f32.xlu0 %v214
  %v399 = vpop.xlane.xlu0 %398
  %400 = vadd.xlane.f32.xlu0 %v215
  %v401 = vpop.xlane.xlu0 %400
  %402 = vadd.xlane.f32.xlu0 %v216
  %v403 = vpop.xlane.xlu0 %402
  %404 = vadd.xlane.f32.xlu0 %v217
  %v405 = vpop.xlane.xlu0 %404
  %406 = vadd.xlane.f32.xlu0 %v218
  %v407 = vpop.xlane.xlu0 %406
  %408 = vadd.xlane.f32.xlu0 %v219
  %v409 = vpop.xlane.xlu0 %408
  %410 = vadd.xlane.f32.xlu0 %v220
  %v411 = vpop.xlane.xlu0 %410
  %412 = vadd.xlane.f32.xlu0 %v221
  %v413 = vpop.xlane.xlu0 %412
  %414 = vadd.xlane.f32.xlu0 %v222
  %v415 = vpop.xlane.xlu0 %414
  %416 = vadd.xlane.f32.xlu0 %v223
  %v417 = vpop.xlane.xlu0 %416
  %418 = vadd.xlane.f32.xlu0 %v224
  %v419 = vpop.xlane.xlu0 %418
  %420 = vadd.xlane.f32.xlu0 %v225
  %v421 = vpop.xlane.xlu0 %420
  %422 = vadd.xlane.f32.xlu0 %v226
  %v423 = vpop.xlane.xlu0 %422
  %424 = vadd.xlane.f32.xlu0 %v227
  %v425 = vpop.xlane.xlu0 %424
  %426 = vadd.xlane.f32.xlu0 %v228
  %v427 = vpop.xlane.xlu0 %426
  %428 = vadd.xlane.f32.xlu0 %v229
  %v429 = vpop.xlane.xlu0 %428
  %430 = vadd.xlane.f32.xlu0 %v230
  %v431 = vpop.xlane.xlu0 %430
  %432 = vadd.xlane.f32.xlu0 %v231
  %v433 = vpop.xlane.xlu0 %432
  %434 = vadd.xlane.f32.xlu0 %v232
  %v435 = vpop.xlane.xlu0 %434
  %436 = vadd.xlane.f32.xlu0 %v233
  %v437 = vpop.xlane.xlu0 %436
  %438 = vadd.xlane.f32.xlu0 %v234
  %v439 = vpop.xlane.xlu0 %438
  %440 = vadd.xlane.f32.xlu0 %v235
  %v441 = vpop.xlane.xlu0 %440
  %442 = vadd.xlane.f32.xlu0 %v236
  %v443 = vpop.xlane.xlu0 %442
  %444 = vadd.xlane.f32.xlu0 %v237
  %v445 = vpop.xlane.xlu0 %444
  %446 = vadd.xlane.f32.xlu0 %v238
  %v447 = vpop.xlane.xlu0 %446
  %448 = vadd.xlane.f32.xlu0 %v239
  %v449 = vpop.xlane.xlu0 %448
  %450 = vadd.xlane.f32.xlu0 %v240
  %v451 = vpop.xlane.xlu0 %450
  %452 = vadd.xlane.f32.xlu0 %v241
  %v453 = vpop.xlane.xlu0 %452
  %454 = vadd.xlane.f32.xlu0 %v242
  %v455 = vpop.xlane.xlu0 %454
  %456 = vadd.xlane.f32.xlu0 %v243
  %v457 = vpop.xlane.xlu0 %456
  %458 = vadd.xlane.f32.xlu0 %v244
  %v459 = vpop.xlane.xlu0 %458
  %460 = vadd.xlane.f32.xlu0 %v245
  %v461 = vpop.xlane.xlu0 %460
  %462 = vadd.xlane.f32.xlu0 %v246
  %v463 = vpop.xlane.xlu0 %462
  %464 = vadd.xlane.f32.xlu0 %v247
  %v465 = vpop.xlane.xlu0 %464
  %466 = vadd.xlane.f32.xlu0 %v248
  %v467 = vpop.xlane.xlu0 %466
  %468 = vadd.xlane.f32.xlu0 %v249
  %v469 = vpop.xlane.xlu0 %468
  %470 = vadd.xlane.f32.xlu0 %v250
  %v471 = vpop.xlane.xlu0 %470
  %472 = vadd.xlane.f32.xlu0 %v251
  %v473 = vpop.xlane.xlu0 %472
  %474 = vadd.xlane.f32.xlu0 %v252
  %v475 = vpop.xlane.xlu0 %474
  %476 = vadd.xlane.f32.xlu0 %v253
  %v477 = vpop.xlane.xlu0 %476
  %478 = vadd.xlane.f32.xlu0 %v254
  %v479 = vpop.xlane.xlu0 %478
  %480 = vadd.xlane.f32.xlu0 %v255
  %v481 = vpop.xlane.xlu0 %480
  %482 = vadd.xlane.f32.xlu0 %v256
  %v483 = vpop.xlane.xlu0 %482
  %484 = vadd.xlane.f32.xlu0 %v257
  %v485 = vpop.xlane.xlu0 %484
  %486 = vadd.xlane.f32.xlu0 %v258
  %v487 = vpop.xlane.xlu0 %486
  %488 = vadd.xlane.f32.xlu0 %v259
  %v489 = vpop.xlane.xlu0 %488
  %490 = vadd.xlane.f32.xlu0 %v260
  %v491 = vpop.xlane.xlu0 %490
  %492 = vadd.xlane.f32.xlu0 %v261
  %v493 = vpop.xlane.xlu0 %492
  %494 = vadd.xlane.f32.xlu0 %v262
  %v495 = vpop.xlane.xlu0 %494
  %496 = vadd.xlane.f32.xlu0 %v263
  %v497 = vpop.xlane.xlu0 %496
  %498 = vadd.xlane.f32.xlu0 %v264
  %v499 = vpop.xlane.xlu0 %498
  %500 = vadd.xlane.f32.xlu0 %v265
  %v501 = vpop.xlane.xlu0 %500
  %502 = vadd.xlane.f32.xlu0 %v266
  %v503 = vpop.xlane.xlu0 %502
  %504 = vadd.xlane.f32.xlu0 %v267
  %v505 = vpop.xlane.xlu0 %504
  %506 = vadd.xlane.f32.xlu0 %v268
  %v507 = vpop.xlane.xlu0 %506
  %508 = vadd.xlane.f32.xlu0 %v269
  %v509 = vpop.xlane.xlu0 %508
  %510 = vadd.xlane.f32.xlu0 %v270
  %v511 = vpop.xlane.xlu0 %510
  %512 = vadd.xlane.f32.xlu0 %v271
  %v513 = vpop.xlane.xlu0 %512
  %514 = vadd.xlane.f32.xlu0 %v272
  %v515 = vpop.xlane.xlu0 %514
  %516 = vadd.xlane.f32.xlu0 %v273
  %v517 = vpop.xlane.xlu0 %516
  %518 = vadd.xlane.f32.xlu0 %v274
  %v519 = vpop.xlane.xlu0 %518
  %520 = vadd.xlane.f32.xlu0 %v275
  %v521 = vpop.xlane.xlu0 %520
  %522 = vadd.xlane.f32.xlu0 %v276
  %v523 = vpop.xlane.xlu0 %522
  %524 = vadd.xlane.f32.xlu0 %v277
  %v525 = vpop.xlane.xlu0 %524
  %526 = vadd.xlane.f32.xlu0 %v278
  %v527 = vpop.xlane.xlu0 %526
  %528 = vadd.xlane.f32.xlu0 %v279
  %v529 = vpop.xlane.xlu0 %528
  %530 = vadd.xlane.f32.xlu0 %v280
  %v531 = vpop.xlane.xlu0 %530
  %532 = vadd.xlane.f32.xlu0 %v281
  %v533 = vpop.xlane.xlu0 %532
  %534 = vadd.xlane.f32.xlu0 %v282
  %v535 = vpop.xlane.xlu0 %534
  %536 = vadd.xlane.f32.xlu0 %v283
  %v537 = vpop.xlane.xlu0 %536
  %538 = vadd.xlane.f32.xlu0 %v284
  %v539 = vpop.xlane.xlu0 %538
  %540 = vadd.xlane.f32.xlu0 %v285
  %v541 = vpop.xlane.xlu0 %540
  %v670 = vlaneseq
  %v671 = vand.u32 %v670, 127
  %v672 = vlaneseq
  %v673 = vshrl.u32 %v672, 7
  %v674 = vsub.s32 %v671, %v673
  %v675 = vrot.slane %v287, %v674
  %v676 = vadd.s32 %v671, 4294967288
  %v677 = vlaneseq
  %v678 = vshrl.u32 %v677, 7
  %v679 = vsub.s32 %v676, %v678
  %v680 = vrot.slane %v289, %v679
  %vm681 = vcmask 130112
  %v682 = vsel %vm681, %v680, %v675
  %v683 = vadd.s32 %v671, 4294967280
  %v684 = vlaneseq
  %v685 = vshrl.u32 %v684, 7
  %v686 = vsub.s32 %v683, %v685
  %v687 = vrot.slane %v291, %v686
  %vm688 = vcmask 195712
  %v689 = vsel %vm688, %v687, %v682
  %v690 = vadd.s32 %v671, 4294967272
  %v691 = vlaneseq
  %v692 = vshrl.u32 %v691, 7
  %v693 = vsub.s32 %v690, %v692
  %v694 = vrot.slane %v293, %v693
  %vm695 = vcmask 261312
  %v696 = vsel %vm695, %v694, %v689
  %v697 = vadd.s32 %v671, 4294967264
  %v698 = vlaneseq
  %v699 = vshrl.u32 %v698, 7
  %v700 = vsub.s32 %v697, %v699
  %v701 = vrot.slane %v295, %v700
  %vm702 = vcmask 326912
  %v703 = vsel %vm702, %v701, %v696
  %v704 = vadd.s32 %v671, 4294967256
  %v705 = vlaneseq
  %v706 = vshrl.u32 %v705, 7
  %v707 = vsub.s32 %v704, %v706
  %v708 = vrot.slane %v297, %v707
  %vm709 = vcmask 392512
  %v710 = vsel %vm709, %v708, %v703
  %v711 = vadd.s32 %v671, 4294967248
  %v712 = vlaneseq
  %v713 = vshrl.u32 %v712, 7
  %v714 = vsub.s32 %v711, %v713
  %v715 = vrot.slane %v299, %v714
  %vm716 = vcmask 458112
  %v717 = vsel %vm716, %v715, %v710
  %v718 = vadd.s32 %v671, 4294967240
  %v719 = vlaneseq
  %v720 = vshrl.u32 %v719, 7
  %v721 = vsub.s32 %v718, %v720
  %v722 = vrot.slane %v301, %v721
  %vm723 = vcmask 523712
  %v724 = vsel %vm723, %v722, %v717
  %v725 = vadd.s32 %v671, 4294967232
  %v726 = vlaneseq
  %v727 = vshrl.u32 %v726, 7
  %v728 = vsub.s32 %v725, %v727
  %v729 = vrot.slane %v303, %v728
  %vm730 = vcmask 589312
  %v731 = vsel %vm730, %v729, %v724
  %v732 = vadd.s32 %v671, 4294967224
  %v733 = vlaneseq
  %v734 = vshrl.u32 %v733, 7
  %v735 = vsub.s32 %v732, %v734
  %v736 = vrot.slane %v305, %v735
  %vm737 = vcmask 654912
  %v738 = vsel %vm737, %v736, %v731
  %v739 = vadd.s32 %v671, 4294967216
  %v740 = vlaneseq
  %v741 = vshrl.u32 %v740, 7
  %v742 = vsub.s32 %v739, %v741
  %v743 = vrot.slane %v307, %v742
  %vm744 = vcmask 720512
  %v745 = vsel %vm744, %v743, %v738
  %v746 = vadd.s32 %v671, 4294967208
  %v747 = vlaneseq
  %v748 = vshrl.u32 %v747, 7
  %v749 = vsub.s32 %v746, %v748
  %v750 = vrot.slane %v309, %v749
  %vm751 = vcmask 786112
  %v752 = vsel %vm751, %v750, %v745
  %v753 = vadd.s32 %v671, 4294967200
  %v754 = vlaneseq
  %v755 = vshrl.u32 %v754, 7
  %v756 = vsub.s32 %v753, %v755
  %v757 = vrot.slane %v311, %v756
  %vm758 = vcmask 851712
  %v759 = vsel %vm758, %v757, %v752
  %v760 = vadd.s32 %v671, 4294967192
  %v761 = vlaneseq
  %v762 = vshrl.u32 %v761, 7
  %v763 = vsub.s32 %v760, %v762
  %v764 = vrot.slane %v313, %v763
  %vm765 = vcmask 917312
  %v766 = vsel %vm765, %v764, %v759
  %v767 = vadd.s32 %v671, 4294967184
  %v768 = vlaneseq
  %v769 = vshrl.u32 %v768, 7
  %v770 = vsub.s32 %v767, %v769
  %v771 = vrot.slane %v315, %v770
  %vm772 = vcmask 982912
  %v773 = vsel %vm772, %v771, %v766
  %v774 = vadd.s32 %v671, 4294967176
  %v775 = vlaneseq
  %v776 = vshrl.u32 %v775, 7
  %v777 = vsub.s32 %v774, %v776
  %v778 = vrot.slane %v317, %v777
  %vm779 = vcmask 1048512
  %v780 = vsel %vm779, %v778, %v773
  %v781 = vlaneseq
  %v782 = vshrl.u32 %v781, 7
  %v783 = vsub.s32 %v671, %v782
  %v784 = vrot.slane %v319, %v783
  %v785 = vlaneseq
  %v786 = vshrl.u32 %v785, 7
  %v787 = vsub.s32 %v676, %v786
  %v788 = vrot.slane %v321, %v787
  %v789 = vsel %vm681, %v788, %v784
  %v790 = vlaneseq
  %v791 = vshrl.u32 %v790, 7
  %v792 = vsub.s32 %v683, %v791
  %v793 = vrot.slane %v323, %v792
  %v794 = vsel %vm688, %v793, %v789
  %v795 = vlaneseq
  %v796 = vshrl.u32 %v795, 7
  %v797 = vsub.s32 %v690, %v796
  %v798 = vrot.slane %v325, %v797
  %v799 = vsel %vm695, %v798, %v794
  %v800 = vlaneseq
  %v801 = vshrl.u32 %v800, 7
  %v802 = vsub.s32 %v697, %v801
  %v803 = vrot.slane %v327, %v802
  %v804 = vsel %vm702, %v803, %v799
  %v805 = vlaneseq
  %v806 = vshrl.u32 %v805, 7
  %v807 = vsub.s32 %v704, %v806
  %v808 = vrot.slane %v329, %v807
  %v809 = vsel %vm709, %v808, %v804
  %v810 = vlaneseq
  %v811 = vshrl.u32 %v810, 7
  %v812 = vsub.s32 %v711, %v811
  %v813 = vrot.slane %v331, %v812
  %v814 = vsel %vm716, %v813, %v809
  %v815 = vlaneseq
  %v816 = vshrl.u32 %v815, 7
  %v817 = vsub.s32 %v718, %v816
  %v818 = vrot.slane %v333, %v817
  %v819 = vsel %vm723, %v818, %v814
  %v820 = vlaneseq
  %v821 = vshrl.u32 %v820, 7
  %v822 = vsub.s32 %v725, %v821
  %v823 = vrot.slane %v335, %v822
  %v824 = vsel %vm730, %v823, %v819
  %v825 = vlaneseq
  %v826 = vshrl.u32 %v825, 7
  %v827 = vsub.s32 %v732, %v826
  %v828 = vrot.slane %v337, %v827
  %v829 = vsel %vm737, %v828, %v824
  %v830 = vlaneseq
  %v831 = vshrl.u32 %v830, 7
  %v832 = vsub.s32 %v739, %v831
  %v833 = vrot.slane %v339, %v832
  %v834 = vsel %vm744, %v833, %v829
  %v835 = vlaneseq
  %v836 = vshrl.u32 %v835, 7
  %v837 = vsub.s32 %v746, %v836
  %v838 = vrot.slane %v341, %v837
  %v839 = vsel %vm751, %v838, %v834
  %v840 = vlaneseq
  %v841 = vshrl.u32 %v840, 7
  %v842 = vsub.s32 %v753, %v841
  %v843 = vrot.slane %v343, %v842
  %v844 = vsel %vm758, %v843, %v839
  %v845 = vlaneseq
  %v846 = vshrl.u32 %v845, 7
  %v847 = vsub.s32 %v760, %v846
  %v848 = vrot.slane %v345, %v847
  %v849 = vsel %vm765, %v848, %v844
  %v850 = vlaneseq
  %v851 = vshrl.u32 %v850, 7
  %v852 = vsub.s32 %v767, %v851
  %v853 = vrot.slane %v347, %v852
  %v854 = vsel %vm772, %v853, %v849
  %v855 = vlaneseq
  %v856 = vshrl.u32 %v855, 7
  %v857 = vsub.s32 %v774, %v856
  %v858 = vrot.slane %v349, %v857
  %v859 = vsel %vm779, %v858, %v854
  %v860 = vlaneseq
  %v861 = vshrl.u32 %v860, 7
  %v862 = vsub.s32 %v671, %v861
  %v863 = vrot.slane %v351, %v862
  %v864 = vlaneseq
  %v865 = vshrl.u32 %v864, 7
  %v866 = vsub.s32 %v676, %v865
  %v867 = vrot.slane %v353, %v866
  %v868 = vsel %vm681, %v867, %v863
  %v869 = vlaneseq
  %v870 = vshrl.u32 %v869, 7
  %v871 = vsub.s32 %v683, %v870
  %v872 = vrot.slane %v355, %v871
  %v873 = vsel %vm688, %v872, %v868
  %v874 = vlaneseq
  %v875 = vshrl.u32 %v874, 7
  %v876 = vsub.s32 %v690, %v875
  %v877 = vrot.slane %v357, %v876
  %v878 = vsel %vm695, %v877, %v873
  %v879 = vlaneseq
  %v880 = vshrl.u32 %v879, 7
  %v881 = vsub.s32 %v697, %v880
  %v882 = vrot.slane %v359, %v881
  %v883 = vsel %vm702, %v882, %v878
  %v884 = vlaneseq
  %v885 = vshrl.u32 %v884, 7
  %v886 = vsub.s32 %v704, %v885
  %v887 = vrot.slane %v361, %v886
  %v888 = vsel %vm709, %v887, %v883
  %v889 = vlaneseq
  %v890 = vshrl.u32 %v889, 7
  %v891 = vsub.s32 %v711, %v890
  %v892 = vrot.slane %v363, %v891
  %v893 = vsel %vm716, %v892, %v888
  %v894 = vlaneseq
  %v895 = vshrl.u32 %v894, 7
  %v896 = vsub.s32 %v718, %v895
  %v897 = vrot.slane %v365, %v896
  %v898 = vsel %vm723, %v897, %v893
  %v899 = vlaneseq
  %v900 = vshrl.u32 %v899, 7
  %v901 = vsub.s32 %v725, %v900
  %v902 = vrot.slane %v367, %v901
  %v903 = vsel %vm730, %v902, %v898
  %v904 = vlaneseq
  %v905 = vshrl.u32 %v904, 7
  %v906 = vsub.s32 %v732, %v905
  %v907 = vrot.slane %v369, %v906
  %v908 = vsel %vm737, %v907, %v903
  %v909 = vlaneseq
  %v910 = vshrl.u32 %v909, 7
  %v911 = vsub.s32 %v739, %v910
  %v912 = vrot.slane %v371, %v911
  %v913 = vsel %vm744, %v912, %v908
  %v914 = vlaneseq
  %v915 = vshrl.u32 %v914, 7
  %v916 = vsub.s32 %v746, %v915
  %v917 = vrot.slane %v373, %v916
  %v918 = vsel %vm751, %v917, %v913
  %v919 = vlaneseq
  %v920 = vshrl.u32 %v919, 7
  %v921 = vsub.s32 %v753, %v920
  %v922 = vrot.slane %v375, %v921
  %v923 = vsel %vm758, %v922, %v918
  %v924 = vlaneseq
  %v925 = vshrl.u32 %v924, 7
  %v926 = vsub.s32 %v760, %v925
  %v927 = vrot.slane %v377, %v926
  %v928 = vsel %vm765, %v927, %v923
  %v929 = vlaneseq
  %v930 = vshrl.u32 %v929, 7
  %v931 = vsub.s32 %v767, %v930
  %v932 = vrot.slane %v379, %v931
  %v933 = vsel %vm772, %v932, %v928
  %v934 = vlaneseq
  %v935 = vshrl.u32 %v934, 7
  %v936 = vsub.s32 %v774, %v935
  %v937 = vrot.slane %v381, %v936
  %v938 = vsel %vm779, %v937, %v933
  %v939 = vlaneseq
  %v940 = vshrl.u32 %v939, 7
  %v941 = vsub.s32 %v671, %v940
  %v942 = vrot.slane %v383, %v941
  %v943 = vlaneseq
  %v944 = vshrl.u32 %v943, 7
  %v945 = vsub.s32 %v676, %v944
  %v946 = vrot.slane %v385, %v945
  %v947 = vsel %vm681, %v946, %v942
  %v948 = vlaneseq
  %v949 = vshrl.u32 %v948, 7
  %v950 = vsub.s32 %v683, %v949
  %v951 = vrot.slane %v387, %v950
  %v952 = vsel %vm688, %v951, %v947
  %v953 = vlaneseq
  %v954 = vshrl.u32 %v953, 7
  %v955 = vsub.s32 %v690, %v954
  %v956 = vrot.slane %v389, %v955
  %v957 = vsel %vm695, %v956, %v952
  %v958 = vlaneseq
  %v959 = vshrl.u32 %v958, 7
  %v960 = vsub.s32 %v697, %v959
  %v961 = vrot.slane %v391, %v960
  %v962 = vsel %vm702, %v961, %v957
  %v963 = vlaneseq
  %v964 = vshrl.u32 %v963, 7
  %v965 = vsub.s32 %v704, %v964
  %v966 = vrot.slane %v393, %v965
  %v967 = vsel %vm709, %v966, %v962
  %v968 = vlaneseq
  %v969 = vshrl.u32 %v968, 7
  %v970 = vsub.s32 %v711, %v969
  %v971 = vrot.slane %v395, %v970
  %v972 = vsel %vm716, %v971, %v967
  %v973 = vlaneseq
  %v974 = vshrl.u32 %v973, 7
  %v975 = vsub.s32 %v718, %v974
  %v976 = vrot.slane %v397, %v975
  %v977 = vsel %vm723, %v976, %v972
  %v978 = vlaneseq
  %v979 = vshrl.u32 %v978, 7
  %v980 = vsub.s32 %v725, %v979
  %v981 = vrot.slane %v399, %v980
  %v982 = vsel %vm730, %v981, %v977
  %v983 = vlaneseq
  %v984 = vshrl.u32 %v983, 7
  %v985 = vsub.s32 %v732, %v984
  %v986 = vrot.slane %v401, %v985
  %v987 = vsel %vm737, %v986, %v982
  %v988 = vlaneseq
  %v989 = vshrl.u32 %v988, 7
  %v990 = vsub.s32 %v739, %v989
  %v991 = vrot.slane %v403, %v990
  %v992 = vsel %vm744, %v991, %v987
  %v993 = vlaneseq
  %v994 = vshrl.u32 %v993, 7
  %v995 = vsub.s32 %v746, %v994
  %v996 = vrot.slane %v405, %v995
  %v997 = vsel %vm751, %v996, %v992
  %v998 = vlaneseq
  %v999 = vshrl.u32 %v998, 7
  %v1000 = vsub.s32 %v753, %v999
  %v1001 = vrot.slane %v407, %v1000
  %v1002 = vsel %vm758, %v1001, %v997
  %v1003 = vlaneseq
  %v1004 = vshrl.u32 %v1003, 7
  %v1005 = vsub.s32 %v760, %v1004
  %v1006 = vrot.slane %v409, %v1005
  %v1007 = vsel %vm765, %v1006, %v1002
  %v1008 = vlaneseq
  %v1009 = vshrl.u32 %v1008, 7
  %v1010 = vsub.s32 %v767, %v1009
  %v1011 = vrot.slane %v411, %v1010
  %v1012 = vsel %vm772, %v1011, %v1007
  %v1013 = vlaneseq
  %v1014 = vshrl.u32 %v1013, 7
  %v1015 = vsub.s32 %v774, %v1014
  %v1016 = vrot.slane %v413, %v1015
  %v1017 = vsel %vm779, %v1016, %v1012
  %v1018 = vlaneseq
  %v1019 = vshrl.u32 %v1018, 7
  %v1020 = vsub.s32 %v671, %v1019
  %v1021 = vrot.slane %v415, %v1020
  %v1022 = vlaneseq
  %v1023 = vshrl.u32 %v1022, 7
  %v1024 = vsub.s32 %v676, %v1023
  %v1025 = vrot.slane %v417, %v1024
  %v1026 = vsel %vm681, %v1025, %v1021
  %v1027 = vlaneseq
  %v1028 = vshrl.u32 %v1027, 7
  %v1029 = vsub.s32 %v683, %v1028
  %v1030 = vrot.slane %v419, %v1029
  %v1031 = vsel %vm688, %v1030, %v1026
  %v1032 = vlaneseq
  %v1033 = vshrl.u32 %v1032, 7
  %v1034 = vsub.s32 %v690, %v1033
  %v1035 = vrot.slane %v421, %v1034
  %v1036 = vsel %vm695, %v1035, %v1031
  %v1037 = vlaneseq
  %v1038 = vshrl.u32 %v1037, 7
  %v1039 = vsub.s32 %v697, %v1038
  %v1040 = vrot.slane %v423, %v1039
  %v1041 = vsel %vm702, %v1040, %v1036
  %v1042 = vlaneseq
  %v1043 = vshrl.u32 %v1042, 7
  %v1044 = vsub.s32 %v704, %v1043
  %v1045 = vrot.slane %v425, %v1044
  %v1046 = vsel %vm709, %v1045, %v1041
  %v1047 = vlaneseq
  %v1048 = vshrl.u32 %v1047, 7
  %v1049 = vsub.s32 %v711, %v1048
  %v1050 = vrot.slane %v427, %v1049
  %v1051 = vsel %vm716, %v1050, %v1046
  %v1052 = vlaneseq
  %v1053 = vshrl.u32 %v1052, 7
  %v1054 = vsub.s32 %v718, %v1053
  %v1055 = vrot.slane %v429, %v1054
  %v1056 = vsel %vm723, %v1055, %v1051
  %v1057 = vlaneseq
  %v1058 = vshrl.u32 %v1057, 7
  %v1059 = vsub.s32 %v725, %v1058
  %v1060 = vrot.slane %v431, %v1059
  %v1061 = vsel %vm730, %v1060, %v1056
  %v1062 = vlaneseq
  %v1063 = vshrl.u32 %v1062, 7
  %v1064 = vsub.s32 %v732, %v1063
  %v1065 = vrot.slane %v433, %v1064
  %v1066 = vsel %vm737, %v1065, %v1061
  %v1067 = vlaneseq
  %v1068 = vshrl.u32 %v1067, 7
  %v1069 = vsub.s32 %v739, %v1068
  %v1070 = vrot.slane %v435, %v1069
  %v1071 = vsel %vm744, %v1070, %v1066
  %v1072 = vlaneseq
  %v1073 = vshrl.u32 %v1072, 7
  %v1074 = vsub.s32 %v746, %v1073
  %v1075 = vrot.slane %v437, %v1074
  %v1076 = vsel %vm751, %v1075, %v1071
  %v1077 = vlaneseq
  %v1078 = vshrl.u32 %v1077, 7
  %v1079 = vsub.s32 %v753, %v1078
  %v1080 = vrot.slane %v439, %v1079
  %v1081 = vsel %vm758, %v1080, %v1076
  %v1082 = vlaneseq
  %v1083 = vshrl.u32 %v1082, 7
  %v1084 = vsub.s32 %v760, %v1083
  %v1085 = vrot.slane %v441, %v1084
  %v1086 = vsel %vm765, %v1085, %v1081
  %v1087 = vlaneseq
  %v1088 = vshrl.u32 %v1087, 7
  %v1089 = vsub.s32 %v767, %v1088
  %v1090 = vrot.slane %v443, %v1089
  %v1091 = vsel %vm772, %v1090, %v1086
  %v1092 = vlaneseq
  %v1093 = vshrl.u32 %v1092, 7
  %v1094 = vsub.s32 %v774, %v1093
  %v1095 = vrot.slane %v445, %v1094
  %v1096 = vsel %vm779, %v1095, %v1091
  %v1097 = vlaneseq
  %v1098 = vshrl.u32 %v1097, 7
  %v1099 = vsub.s32 %v671, %v1098
  %v1100 = vrot.slane %v447, %v1099
  %v1101 = vlaneseq
  %v1102 = vshrl.u32 %v1101, 7
  %v1103 = vsub.s32 %v676, %v1102
  %v1104 = vrot.slane %v449, %v1103
  %v1105 = vsel %vm681, %v1104, %v1100
  %v1106 = vlaneseq
  %v1107 = vshrl.u32 %v1106, 7
  %v1108 = vsub.s32 %v683, %v1107
  %v1109 = vrot.slane %v451, %v1108
  %v1110 = vsel %vm688, %v1109, %v1105
  %v1111 = vlaneseq
  %v1112 = vshrl.u32 %v1111, 7
  %v1113 = vsub.s32 %v690, %v1112
  %v1114 = vrot.slane %v453, %v1113
  %v1115 = vsel %vm695, %v1114, %v1110
  %v1116 = vlaneseq
  %v1117 = vshrl.u32 %v1116, 7
  %v1118 = vsub.s32 %v697, %v1117
  %v1119 = vrot.slane %v455, %v1118
  %v1120 = vsel %vm702, %v1119, %v1115
  %v1121 = vlaneseq
  %v1122 = vshrl.u32 %v1121, 7
  %v1123 = vsub.s32 %v704, %v1122
  %v1124 = vrot.slane %v457, %v1123
  %v1125 = vsel %vm709, %v1124, %v1120
  %v1126 = vlaneseq
  %v1127 = vshrl.u32 %v1126, 7
  %v1128 = vsub.s32 %v711, %v1127
  %v1129 = vrot.slane %v459, %v1128
  %v1130 = vsel %vm716, %v1129, %v1125
  %v1131 = vlaneseq
  %v1132 = vshrl.u32 %v1131, 7
  %v1133 = vsub.s32 %v718, %v1132
  %v1134 = vrot.slane %v461, %v1133
  %v1135 = vsel %vm723, %v1134, %v1130
  %v1136 = vlaneseq
  %v1137 = vshrl.u32 %v1136, 7
  %v1138 = vsub.s32 %v725, %v1137
  %v1139 = vrot.slane %v463, %v1138
  %v1140 = vsel %vm730, %v1139, %v1135
  %v1141 = vlaneseq
  %v1142 = vshrl.u32 %v1141, 7
  %v1143 = vsub.s32 %v732, %v1142
  %v1144 = vrot.slane %v465, %v1143
  %v1145 = vsel %vm737, %v1144, %v1140
  %v1146 = vlaneseq
  %v1147 = vshrl.u32 %v1146, 7
  %v1148 = vsub.s32 %v739, %v1147
  %v1149 = vrot.slane %v467, %v1148
  %v1150 = vsel %vm744, %v1149, %v1145
  %v1151 = vlaneseq
  %v1152 = vshrl.u32 %v1151, 7
  %v1153 = vsub.s32 %v746, %v1152
  %v1154 = vrot.slane %v469, %v1153
  %v1155 = vsel %vm751, %v1154, %v1150
  %v1156 = vlaneseq
  %v1157 = vshrl.u32 %v1156, 7
  %v1158 = vsub.s32 %v753, %v1157
  %v1159 = vrot.slane %v471, %v1158
  %v1160 = vsel %vm758, %v1159, %v1155
  %v1161 = vlaneseq
  %v1162 = vshrl.u32 %v1161, 7
  %v1163 = vsub.s32 %v760, %v1162
  %v1164 = vrot.slane %v473, %v1163
  %v1165 = vsel %vm765, %v1164, %v1160
  %v1166 = vlaneseq
  %v1167 = vshrl.u32 %v1166, 7
  %v1168 = vsub.s32 %v767, %v1167
  %v1169 = vrot.slane %v475, %v1168
  %v1170 = vsel %vm772, %v1169, %v1165
  %v1171 = vlaneseq
  %v1172 = vshrl.u32 %v1171, 7
  %v1173 = vsub.s32 %v774, %v1172
  %v1174 = vrot.slane %v477, %v1173
  %v1175 = vsel %vm779, %v1174, %v1170
  %v1176 = vlaneseq
  %v1177 = vshrl.u32 %v1176, 7
  %v1178 = vsub.s32 %v671, %v1177
  %v1179 = vrot.slane %v479, %v1178
  %v1180 = vlaneseq
  %v1181 = vshrl.u32 %v1180, 7
  %v1182 = vsub.s32 %v676, %v1181
  %v1183 = vrot.slane %v481, %v1182
  %v1184 = vsel %vm681, %v1183, %v1179
  %v1185 = vlaneseq
  %v1186 = vshrl.u32 %v1185, 7
  %v1187 = vsub.s32 %v683, %v1186
  %v1188 = vrot.slane %v483, %v1187
  %v1189 = vsel %vm688, %v1188, %v1184
  %v1190 = vlaneseq
  %v1191 = vshrl.u32 %v1190, 7
  %v1192 = vsub.s32 %v690, %v1191
  %v1193 = vrot.slane %v485, %v1192
  %v1194 = vsel %vm695, %v1193, %v1189
  %v1195 = vlaneseq
  %v1196 = vshrl.u32 %v1195, 7
  %v1197 = vsub.s32 %v697, %v1196
  %v1198 = vrot.slane %v487, %v1197
  %v1199 = vsel %vm702, %v1198, %v1194
  %v1200 = vlaneseq
  %v1201 = vshrl.u32 %v1200, 7
  %v1202 = vsub.s32 %v704, %v1201
  %v1203 = vrot.slane %v489, %v1202
  %v1204 = vsel %vm709, %v1203, %v1199
  %v1205 = vlaneseq
  %v1206 = vshrl.u32 %v1205, 7
  %v1207 = vsub.s32 %v711, %v1206
  %v1208 = vrot.slane %v491, %v1207
  %v1209 = vsel %vm716, %v1208, %v1204
  %v1210 = vlaneseq
  %v1211 = vshrl.u32 %v1210, 7
  %v1212 = vsub.s32 %v718, %v1211
  %v1213 = vrot.slane %v493, %v1212
  %v1214 = vsel %vm723, %v1213, %v1209
  %v1215 = vlaneseq
  %v1216 = vshrl.u32 %v1215, 7
  %v1217 = vsub.s32 %v725, %v1216
  %v1218 = vrot.slane %v495, %v1217
  %v1219 = vsel %vm730, %v1218, %v1214
  %v1220 = vlaneseq
  %v1221 = vshrl.u32 %v1220, 7
  %v1222 = vsub.s32 %v732, %v1221
  %v1223 = vrot.slane %v497, %v1222
  %v1224 = vsel %vm737, %v1223, %v1219
  %v1225 = vlaneseq
  %v1226 = vshrl.u32 %v1225, 7
  %v1227 = vsub.s32 %v739, %v1226
  %v1228 = vrot.slane %v499, %v1227
  %v1229 = vsel %vm744, %v1228, %v1224
  %v1230 = vlaneseq
  %v1231 = vshrl.u32 %v1230, 7
  %v1232 = vsub.s32 %v746, %v1231
  %v1233 = vrot.slane %v501, %v1232
  %v1234 = vsel %vm751, %v1233, %v1229
  %v1235 = vlaneseq
  %v1236 = vshrl.u32 %v1235, 7
  %v1237 = vsub.s32 %v753, %v1236
  %v1238 = vrot.slane %v503, %v1237
  %v1239 = vsel %vm758, %v1238, %v1234
  %v1240 = vlaneseq
  %v1241 = vshrl.u32 %v1240, 7
  %v1242 = vsub.s32 %v760, %v1241
  %v1243 = vrot.slane %v505, %v1242
  %v1244 = vsel %vm765, %v1243, %v1239
  %v1245 = vlaneseq
  %v1246 = vshrl.u32 %v1245, 7
  %v1247 = vsub.s32 %v767, %v1246
  %v1248 = vrot.slane %v507, %v1247
  %v1249 = vsel %vm772, %v1248, %v1244
  %v1250 = vlaneseq
  %v1251 = vshrl.u32 %v1250, 7
  %v1252 = vsub.s32 %v774, %v1251
  %v1253 = vrot.slane %v509, %v1252
  %v1254 = vsel %vm779, %v1253, %v1249
  %v1255 = vlaneseq
  %v1256 = vshrl.u32 %v1255, 7
  %v1257 = vsub.s32 %v671, %v1256
  %v1258 = vrot.slane %v511, %v1257
  %v1259 = vlaneseq
  %v1260 = vshrl.u32 %v1259, 7
  %v1261 = vsub.s32 %v676, %v1260
  %v1262 = vrot.slane %v513, %v1261
  %v1263 = vsel %vm681, %v1262, %v1258
  %v1264 = vlaneseq
  %v1265 = vshrl.u32 %v1264, 7
  %v1266 = vsub.s32 %v683, %v1265
  %v1267 = vrot.slane %v515, %v1266
  %v1268 = vsel %vm688, %v1267, %v1263
  %v1269 = vlaneseq
  %v1270 = vshrl.u32 %v1269, 7
  %v1271 = vsub.s32 %v690, %v1270
  %v1272 = vrot.slane %v517, %v1271
  %v1273 = vsel %vm695, %v1272, %v1268
  %v1274 = vlaneseq
  %v1275 = vshrl.u32 %v1274, 7
  %v1276 = vsub.s32 %v697, %v1275
  %v1277 = vrot.slane %v519, %v1276
  %v1278 = vsel %vm702, %v1277, %v1273
  %v1279 = vlaneseq
  %v1280 = vshrl.u32 %v1279, 7
  %v1281 = vsub.s32 %v704, %v1280
  %v1282 = vrot.slane %v521, %v1281
  %v1283 = vsel %vm709, %v1282, %v1278
  %v1284 = vlaneseq
  %v1285 = vshrl.u32 %v1284, 7
  %v1286 = vsub.s32 %v711, %v1285
  %v1287 = vrot.slane %v523, %v1286
  %v1288 = vsel %vm716, %v1287, %v1283
  %v1289 = vlaneseq
  %v1290 = vshrl.u32 %v1289, 7
  %v1291 = vsub.s32 %v718, %v1290
  %v1292 = vrot.slane %v525, %v1291
  %v1293 = vsel %vm723, %v1292, %v1288
  %v1294 = vlaneseq
  %v1295 = vshrl.u32 %v1294, 7
  %v1296 = vsub.s32 %v725, %v1295
  %v1297 = vrot.slane %v527, %v1296
  %v1298 = vsel %vm730, %v1297, %v1293
  %v1299 = vlaneseq
  %v1300 = vshrl.u32 %v1299, 7
  %v1301 = vsub.s32 %v732, %v1300
  %v1302 = vrot.slane %v529, %v1301
  %v1303 = vsel %vm737, %v1302, %v1298
  %v1304 = vlaneseq
  %v1305 = vshrl.u32 %v1304, 7
  %v1306 = vsub.s32 %v739, %v1305
  %v1307 = vrot.slane %v531, %v1306
  %v1308 = vsel %vm744, %v1307, %v1303
  %v1309 = vlaneseq
  %v1310 = vshrl.u32 %v1309, 7
  %v1311 = vsub.s32 %v746, %v1310
  %v1312 = vrot.slane %v533, %v1311
  %v1313 = vsel %vm751, %v1312, %v1308
  %v1314 = vlaneseq
  %v1315 = vshrl.u32 %v1314, 7
  %v1316 = vsub.s32 %v753, %v1315
  %v1317 = vrot.slane %v535, %v1316
  %v1318 = vsel %vm758, %v1317, %v1313
  %v1319 = vlaneseq
  %v1320 = vshrl.u32 %v1319, 7
  %v1321 = vsub.s32 %v760, %v1320
  %v1322 = vrot.slane %v537, %v1321
  %v1323 = vsel %vm765, %v1322, %v1318
  %v1324 = vlaneseq
  %v1325 = vshrl.u32 %v1324, 7
  %v1326 = vsub.s32 %v767, %v1325
  %v1327 = vrot.slane %v539, %v1326
  %v1328 = vsel %vm772, %v1327, %v1323
  %v1329 = vlaneseq
  %v1330 = vshrl.u32 %v1329, 7
  %v1331 = vsub.s32 %v774, %v1330
  %v1332 = vrot.slane %v541, %v1331
  %v1333 = vsel %vm779, %v1332, %v1328
  %vm1334 = vcmask 1041409
  %v1335 = vsel %vm1334, %v859, %v780
  %vm1336 = vcmask 1042434
  %v1337 = vsel %vm1336, %v938, %v1335
  %vm1338 = vcmask 1043459
  %v1339 = vsel %vm1338, %v1017, %v1337
  %vm1340 = vcmask 1044484
  %v1341 = vsel %vm1340, %v1096, %v1339
  %vm1342 = vcmask 1045509
  %v1343 = vsel %vm1342, %v1175, %v1341
  %vm1344 = vcmask 1046534
  %v1345 = vsel %vm1344, %v1254, %v1343
  %vm1346 = vcmask 1047559
  %v1347 = vsel %vm1346, %v1333, %v1345
  %1349 = vadd.xlane.f32.xlu0 %v1347
  %v1350 = vpop.xlane.xlu0 %1349
  %v1351 = vld [vmem:[%s2] sm:$0x1]
  %v1353 = vlaneseq
  %v1354 = vshrl.u32 %v1353, 7
  %v1355 = vsub.s32 0, %v1354
  %v1356 = vrot.slane %v1351, %v1355
  %v1358 = vadd.f32 %v1350, %v1356
  %1359 = vst [vmem:[%s3] sm:$0xff] %v1358
  // Predicated region
  $region14: #{svm_forward.1} parent=0 // pred_check
    _
  $region15: #{svm_forward.1} parent=0 // pred_check_branch
    %1361 = sbr.rel (0) target = $region17
  $region16: #{svm_forward.1} parent=0 // pred_region
    _
  $region17: #{svm_forward.1} parent=0 // pred_fallthru
    _
  // Predicated region
  $region18: #{svm_forward.1} parent=0 // pred_check
    _
  $region19: #{svm_forward.1} parent=0 // pred_check_branch
    %1363 = sbr.rel (0) target = $region21
  $region20: #{svm_forward.1} parent=0 // pred_region
    _
  $region21: #{svm_forward.1} parent=0 // pred_fallthru
    _

</llo_original>
